<compile_context>
chip_gen: v5e
topology: v5e:2x2
jax: 0.10.0
libtpu: 0.0.40
codegen_flags: <defaults>
</compile_context>

<pallas_src>
import jax
import jax.numpy as jnp
import numpy as np
from jax.experimental import pallas as pl
from jax.experimental.pallas import tpu as pltpu


# ----------------------------------------------------------------------------- kernel

def embeddings_kernel(patches_ref, w_ref, posb_ref, o_ref):
    # patches_ref: (TM, K_pad)  im2col'd patch rows (TM = BB*N, batch folded into M)
    # w_ref:       (K_pad, H)   projection weight (conv weight reshaped/padded, shared)
    # posb_ref:    (TM, H)      f32 (position-embedding[1:] + conv bias), tiled to TM rows
    # o_ref:       (TM, H)      output patch embeddings
    proj = jnp.dot(patches_ref[...], w_ref[...],
                   preferred_element_type=jnp.float32)        # one big MXU matmul per step
    o_ref[...] = (proj + posb_ref[...]).astype(o_ref.dtype)   # fused f32 epilogue, lane-dense store


# ----------------------------------------------------------------------------- wrapper

def vit_embeddings_forward(x, conv_w, conv_b, cls_token, pos_emb, *,
                           patch_size, compute_dtype=jnp.bfloat16, out_dtype=None,
                           rows_target=512):
    """x: (B, C, Himg, Wimg). conv_w: (H, C, P, P). conv_b: (H,).
    cls_token: (1, 1, H). pos_emb: (1, n_patches+1, H)."""
    B, C, Himg, Wimg = x.shape
    P = patch_size
    GH, GW = Himg // P, Wimg // P
    N = GH * GW
    H = conv_w.shape[0]
    K = C * P * P
    if out_dtype is None:
        out_dtype = compute_dtype

    # --- im2col (layout plumbing): cast FIRST so the transpose moves compute_dtype bytes,
    #     then fold the K -> K_pad zero-pad into the same prologue pass.
    #     Row order = (b, gh, gw); per-row flatten order (c, ph, pw) == conv-weight flatten order.
    K_pad = ((K + 127) // 128) * 128
    patches = (x.astype(compute_dtype)
               .reshape(B, C, GH, P, GW, P)
               .transpose(0, 2, 4, 1, 3, 5)
               .reshape(B * N, K))
    if K_pad != K:
        patches = jnp.pad(patches, ((0, 0), (0, K_pad - K)))

    w2d = conv_w.astype(compute_dtype).reshape(H, K).T        # (K, H)
    if K_pad != K:
        w2d = jnp.pad(w2d, ((0, K_pad - K), (0, 0)))

    # --- tile choice: BB whole batch elements per grid step (TM = BB*N rows), targeting
    #     ~rows_target rows per matmul so the 256x256 MXU is well fed and per-step overhead
    #     is amortized.  TM must be a multiple of 8 (sublane) unless the grid is a single tile.
    BB = max(1, min(B, max(1, rows_target // N)))
    while (BB * N) % 8 != 0 and BB < B:
        BB += 1
    if (BB * N) % 8 != 0:
        BB = B                                                # single tile: full-dim block is legal
    B_pad = -(-B // BB) * BB
    if B_pad != B:
        patches = jnp.pad(patches, ((0, (B_pad - B) * N), (0, 0)))
    TM = BB * N
    grid = (B_pad // BB,)

    # --- fold conv bias into the patch-row position embeddings; keep the epilogue table f32.
    pos_bias = (pos_emb[0, 1:, :].astype(jnp.float32)
                + conv_b[None, :].astype(jnp.float32))        # (N, H)
    pos_bias_tiled = jnp.tile(pos_bias, (BB, 1))              # (TM, H), row r -> pos[r % N]

    # --- VMEM budget: double-buffered patch/output tiles + weight + pos table + slack,
    #     clamped to <=32 MiB (leaves headroom on v7x's 64 MiB physical VMEM).
    itm_in = jnp.dtype(compute_dtype).itemsize
    itm_out = jnp.dtype(out_dtype).itemsize
    vmem_bytes = (2 * TM * K_pad * itm_in
                  + 2 * TM * H * itm_out
                  + 2 * K_pad * H * itm_in
                  + 2 * TM * H * 4
                  + (4 << 20))
    vmem_bytes = int(min(max(vmem_bytes, 16 << 20), 32 << 20))

    patch_emb = pl.pallas_call(
        embeddings_kernel,
        out_shape=jax.ShapeDtypeStruct((B_pad * N, H), out_dtype),
        grid=grid,
        in_specs=[
            pl.BlockSpec((TM, K_pad), lambda i: (i, 0)),      # patch-row tile
            pl.BlockSpec((K_pad, H), lambda i: (0, 0)),       # shared projection weight
            pl.BlockSpec((TM, H), lambda i: (0, 0)),          # pos[1:] + bias (f32)
        ],
        out_specs=pl.BlockSpec((TM, H), lambda i: (i, 0)),
        compiler_params=pltpu.CompilerParams(
            dimension_semantics=("parallel",),                # M tiles are independent
            vmem_limit_bytes=vmem_bytes,
        ),
    )(patches, w2d, pos_bias_tiled)

    patch_emb = patch_emb[: B * N].reshape(B, N, H)

    # --- cls row (+ pos[0]) is only B*H elements: assembled in the wrapper, not the kernel.
    cls_row = (cls_token.reshape(1, 1, H).astype(jnp.float32)
               + pos_emb[:, 0:1, :].astype(jnp.float32)).astype(out_dtype)
    cls_row = jnp.broadcast_to(cls_row, (B, 1, H))
    # TODO(synk): dropout (config.transformer['dropout_rate']) treated as identity.
    return jnp.concatenate([cls_row, patch_emb], axis=1)      # (B, N+1, H)


# ----------------------------------------------------------------------------- reference (pure JAX)

def embeddings_reference(x, conv_w, conv_b, cls_token, pos_emb, *, patch_size):
    B = x.shape[0]
    H = conv_w.shape[0]
    y = jax.lax.conv_general_dilated(
        x, conv_w, window_strides=(patch_size, patch_size), padding="VALID",
        dimension_numbers=("NCHW", "OIHW", "NCHW"),
        precision=jax.lax.Precision.HIGHEST)                  # (B, H, GH, GW)
    y = y + conv_b[None, :, None, None]
    y = y.reshape(B, H, -1).transpose(0, 2, 1)                # flatten(2).transpose(-1,-2)
    cls = jnp.broadcast_to(cls_token, (B, 1, H))
    return jnp.concatenate([cls, y], axis=1) + pos_emb        # dropout = identity


# ----------------------------------------------------------------------------- main

if __name__ == "__main__":
    B, C, IMG, PATCH = 2, 6, 16, 4        # in_channels=6 (module default), 4x4 patch grid
    HIDDEN = 128                          # lane-dense hidden size
    N_PATCHES = (IMG // PATCH) ** 2       # 16

    key = jax.random.PRNGKey(0)
    k1, k2, k3, k4, k5 = jax.random.split(key, 5)
    x = jax.random.normal(k1, (B, C, IMG, IMG), jnp.float32)
    conv_w = 0.05 * jax.random.normal(k2, (HIDDEN, C, PATCH, PATCH), jnp.float32)
    conv_b = 0.02 * jax.random.normal(k3, (HIDDEN,), jnp.float32)
    cls_token = 0.02 * jax.random.normal(k4, (1, 1, HIDDEN), jnp.float32)
    pos_emb = 0.02 * jax.random.normal(k5, (1, N_PATCHES + 1, HIDDEN), jnp.float32)

    ref = embeddings_reference(x, conv_w, conv_b, cls_token, pos_emb, patch_size=PATCH)

    # f32 path: exact-ish comparison against the conv reference.
    out_f32 = vit_embeddings_forward(x, conv_w, conv_b, cls_token, pos_emb,
                                     patch_size=PATCH,
                                     compute_dtype=jnp.float32, out_dtype=jnp.float32)
    out_f32 = jax.block_until_ready(out_f32)
    np.testing.assert_allclose(np.asarray(out_f32), np.asarray(ref), atol=1e-4, rtol=1e-4)

    # default bf16 path: looser tolerance (expected bf16 input/output rounding, f32 accumulation).
    out_bf16 = vit_embeddings_forward(x, conv_w, conv_b, cls_token, pos_emb, patch_size=PATCH)
    out_bf16 = jax.block_until_ready(out_bf16)
    np.testing.assert_allclose(np.asarray(out_bf16.astype(jnp.float32)), np.asarray(ref),
                               atol=3e-2, rtol=3e-2)

    print("KERNEL_OK")
</pallas_src>

<mosaic_0001>
module attributes {stable_mosaic.version = 11 : i64} {
  func.func @embeddings_kernel(%arg0: i32, %arg1: memref<32x128xf32, #tpu.memory_space<vmem>>, %arg2: memref<128x128xf32, #tpu.memory_space<vmem>>, %arg3: memref<32x128xf32, #tpu.memory_space<vmem>>, %arg4: memref<32x128xf32, #tpu.memory_space<vmem>>) attributes {dimension_semantics = [#tpu.dimension_semantics<parallel>], iteration_bounds = array<i64: 1>, scalar_prefetch = 0 : i64, scratch_operands = 0 : i64, tpu.core_type = #tpu.core_type<tc>, window_params = [{transform_indices = @transform_0, window_bounds = array<i64: 32, 128>}, {pipeline_mode = #tpu.pipeline_mode<synchronous>, transform_indices = @transform_1, window_bounds = array<i64: 128, 128>}, {pipeline_mode = #tpu.pipeline_mode<synchronous>, transform_indices = @transform_2, window_bounds = array<i64: 32, 128>}, {transform_indices = @transform_3, window_bounds = array<i64: 32, 128>}]} {
    %c0 = arith.constant 0 : index
    %c0_0 = arith.constant 0 : index
    %0 = vector.load %arg1[%c0, %c0_0] : memref<32x128xf32, #tpu.memory_space<vmem>>, vector<32x128xf32>
    %c0_1 = arith.constant 0 : index
    %c0_2 = arith.constant 0 : index
    %1 = vector.load %arg2[%c0_1, %c0_2] : memref<128x128xf32, #tpu.memory_space<vmem>>, vector<128x128xf32>
    %cst = arith.constant dense<0.000000e+00> : vector<32x128xf32>
    %2 = tpu.matmul %0, %1, %cst {dimension_numbers = #tpu.dot_dimension_numbers<[1], [0], [0], [1], [0, 0, 1, 1], [], []>} : vector<32x128xf32>, vector<128x128xf32>, vector<32x128xf32> -> vector<32x128xf32>
    %c0_3 = arith.constant 0 : index
    %c0_4 = arith.constant 0 : index
    %3 = vector.load %arg3[%c0_3, %c0_4] : memref<32x128xf32, #tpu.memory_space<vmem>>, vector<32x128xf32>
    %4 = arith.addf %2, %3 : vector<32x128xf32>
    %c0_5 = arith.constant 0 : index
    %c0_6 = arith.constant 0 : index
    %5 = vector.load %arg4[%c0_5, %c0_6] : memref<32x128xf32, #tpu.memory_space<vmem>>, vector<32x128xf32>
    tpu.vector_store %arg4[%c0_5, %c0_6], %4 {strides = array<i32>} : memref<32x128xf32, #tpu.memory_space<vmem>>, vector<32x128xf32>,
    return
  }
  func.func @transform_0(%arg0: i32) -> (i32, i32) {
    %c0_i32 = arith.constant 0 : i32
    %c0_i32_0 = arith.constant 0 : i32
    return %arg0, %c0_i32 : i32, i32
  }
  func.func @transform_1(%arg0: i32) -> (i32, i32) {
    %c0_i32 = arith.constant 0 : i32
    %c0_i32_0 = arith.constant 0 : i32
    %c0_i32_1 = arith.constant 0 : i32
    return %c0_i32, %c0_i32_0 : i32, i32
  }
  func.func @transform_2(%arg0: i32) -> (i32, i32) {
    %c0_i32 = arith.constant 0 : i32
    %c0_i32_0 = arith.constant 0 : i32
    %c0_i32_1 = arith.constant 0 : i32
    return %c0_i32, %c0_i32_0 : i32, i32
  }
  func.func @transform_3(%arg0: i32) -> (i32, i32) {
    %c0_i32 = arith.constant 0 : i32
    %c0_i32_0 = arith.constant 0 : i32
    return %arg0, %c0_i32 : i32, i32
  }
}

</mosaic_0001>

<llo_original>
// kernel: tpu_custom_call.1
$region0: #{tpu_custom_call.1}
  #allocation0 [shape = 'u32[]', space=smem, size = 0x4, offset = 0x4, fixed_abs, tag = 'smem constant byte address 0x4 - core index']
  #allocation1 [shape = 'u32[72,128]{1,0:T(1,128)}', space=vmem, size = 0x9000, scoped, tag = 'internal scratch']
  %s0 = inlined_call_operand.hbm [shape: f32[32,128], index: 0, kind: input, shape index: {}]
  %s1 = inlined_call_operand.hbm [shape: f32[128,128], index: 1, kind: input, shape index: {}]
  %s2 = inlined_call_operand.hbm [shape: f32[32,128], index: 2, kind: input, shape index: {}]
  %s3 = inlined_call_operand.hbm [shape: f32[32,128], index: 3, kind: output, shape index: {}]
  %s4 = sld [smem:[#allocation0]]
  $region34: #{tpu_custom_call.1} parent=0
    _
  %s6 = ssub.s32 1, %s4
  %s7 = scalar_select 0, %s6, %s4
  $region1: #{tpu_custom_call.1} parent=0
    #allocation2 [shape = 'u8[16384]{0}', space=vmem, size = 0x4000, scoped, tag = 'input window, operand 0, single buffered']
    #allocation3 [shape = 's32[1]{0}', space=sflag, size = 0x4, scoped, tag = 'scoped memory for tpu_custom_call.1']
    #allocation4 [shape = 's32[1]{0}', space=sflag, size = 0x4, scoped, tag = 'scoped memory for tpu_custom_call.1']
    #allocation5 [shape = 'u8[65536]{0}', space=vmem, size = 0x10000, scoped, tag = 'input window, operand 1, single buffered']
    #allocation6 [shape = 's32[1]{0}', space=sflag, size = 0x4, scoped, tag = 'scoped memory for tpu_custom_call.1']
    #allocation7 [shape = 'u8[16384]{0}', space=vmem, size = 0x4000, scoped, tag = 'input window, operand 2, single buffered']
    #allocation8 [shape = 'u8[16384]{0}', space=vmem, size = 0x4000, scoped, tag = 'output window, operand 0, single buffered']
    %8 = vsyncpa [#allocation3], 0
    %9 = vsyncpa [#allocation6], 0
    %10 = vsyncpa [#allocation4], 0
    // Predicated region
    $region2: #{tpu_custom_call.1} parent=1 // pred_check
      _
    $region3: #{tpu_custom_call.1} parent=1 // pred_check_branch
      %12 = sbr.rel (0) target = $region5
    $region4: #{tpu_custom_call.1} parent=1 // pred_region
      %14 = vsyncadd [#allocation3], 0
      %s15 = sshll.u32 %s0, 4
      %s16 = int_to_ptr.hbm [resolvable:$true] %s15
      %s17 = sshll.u32 [#allocation2], 4
      %s18 = int_to_ptr.vmem [resolvable:$true] %s17
      %23 = dma.hbm_to_vmem [thread:$0]  %s16, 512, %s18, [#allocation3], 128, 128, 8
    $region5: #{tpu_custom_call.1} parent=1 // pred_fallthru
      _
    // Predicated region
    $region6: #{tpu_custom_call.1} parent=1 // pred_check
      _
    $region7: #{tpu_custom_call.1} parent=1 // pred_check_branch
      %25 = sbr.rel (0) target = $region9
    $region8: #{tpu_custom_call.1} parent=1 // pred_region
      %27 = vsyncadd [#allocation6], 0
      %s28 = sshll.u32 %s1, 4
      %s29 = int_to_ptr.hbm [resolvable:$true] %s28
      %s30 = sshll.u32 [#allocation5], 4
      %s31 = int_to_ptr.vmem [resolvable:$true] %s30
      %36 = dma.hbm_to_vmem [thread:$0]  %s29, 2048, %s31, [#allocation6], 128, 128, 8
    $region9: #{tpu_custom_call.1} parent=1 // pred_fallthru
      _
    // Predicated region
    $region10: #{tpu_custom_call.1} parent=1 // pred_check
      _
    $region11: #{tpu_custom_call.1} parent=1 // pred_check_branch
      %38 = sbr.rel (0) target = $region13
    $region12: #{tpu_custom_call.1} parent=1 // pred_region
      %40 = vsyncadd [#allocation6], 0
      %s41 = sshll.u32 %s2, 4
      %s42 = int_to_ptr.hbm [resolvable:$true] %s41
      %s43 = sshll.u32 [#allocation7], 4
      %s44 = int_to_ptr.vmem [resolvable:$true] %s43
      %49 = dma.hbm_to_vmem [thread:$0]  %s42, 512, %s44, [#allocation6], 128, 128, 8
    $region13: #{tpu_custom_call.1} parent=1 // pred_fallthru
      _
    // Predicated region
    $region14: #{tpu_custom_call.1} parent=1 // pred_check
      _
    $region15: #{tpu_custom_call.1} parent=1 // pred_check_branch
      %51 = sbr.rel (0) target = $region17
    $region16: #{tpu_custom_call.1} parent=1 // pred_region
      %53 = dma.done [#allocation3], 512
    $region17: #{tpu_custom_call.1} parent=1 // pred_fallthru
      _
    // Predicated region
    $region18: #{tpu_custom_call.1} parent=1 // pred_check
      _
    $region19: #{tpu_custom_call.1} parent=1 // pred_check_branch
      %55 = sbr.rel (0) target = $region21
    $region20: #{tpu_custom_call.1} parent=1 // pred_region
      %57 = dma.done [#allocation6], 2048
    $region21: #{tpu_custom_call.1} parent=1 // pred_fallthru
      _
    // Predicated region
    $region22: #{tpu_custom_call.1} parent=1 // pred_check
      _
    $region23: #{tpu_custom_call.1} parent=1 // pred_check_branch
      %59 = sbr.rel (0) target = $region25
    $region24: #{tpu_custom_call.1} parent=1 // pred_region
      %61 = dma.done [#allocation6], 512
    $region25: #{tpu_custom_call.1} parent=1 // pred_fallthru
      _
    %v62 = vld [vmem:[#allocation2] sm:$0xff]
    %v63 = vld [vmem:[#allocation2 + $0x8] sm:$0xff]
    %v64 = vld [vmem:[#allocation2 + $0x10] sm:$0xff]
    %v65 = vld [vmem:[#allocation2 + $0x18] sm:$0xff]
    %v66 = vld [vmem:[#allocation5] sm:$0xff]
    %v67 = vld [vmem:[#allocation5 + $0x8] sm:$0xff]
    %v68 = vld [vmem:[#allocation5 + $0x10] sm:$0xff]
    %v69 = vld [vmem:[#allocation5 + $0x18] sm:$0xff]
    %v70 = vld [vmem:[#allocation5 + $0x20] sm:$0xff]
    %v71 = vld [vmem:[#allocation5 + $0x28] sm:$0xff]
    %v72 = vld [vmem:[#allocation5 + $0x30] sm:$0xff]
    %v73 = vld [vmem:[#allocation5 + $0x38] sm:$0xff]
    %v74 = vld [vmem:[#allocation5 + $0x40] sm:$0xff]
    %v75 = vld [vmem:[#allocation5 + $0x48] sm:$0xff]
    %v76 = vld [vmem:[#allocation5 + $0x50] sm:$0xff]
    %v77 = vld [vmem:[#allocation5 + $0x58] sm:$0xff]
    %v78 = vld [vmem:[#allocation5 + $0x60] sm:$0xff]
    %v79 = vld [vmem:[#allocation5 + $0x68] sm:$0xff]
    %v80 = vld [vmem:[#allocation5 + $0x70] sm:$0xff]
    %v81 = vld [vmem:[#allocation5 + $0x78] sm:$0xff]
    %v82 = vld [vmem:[#allocation7] sm:$0xff]
    %v83 = vld [vmem:[#allocation7 + $0x8] sm:$0xff]
    %v84 = vld [vmem:[#allocation7 + $0x10] sm:$0xff]
    %v85 = vld [vmem:[#allocation7 + $0x18] sm:$0xff]
    %86 = vmatpush.msra.mxu0 %v81
    %87 = vmatpush.msra.mxu0 %v80
    %88 = vmatpush.msra.mxu0 %v79
    %89 = vmatpush.msra.mxu0 %v78
    %90 = vmatpush.msra.mxu0 %v77
    %91 = vmatpush.msra.mxu0 %v76
    %92 = vmatpush.msra.mxu0 %v75
    %93 = vmatpush.msra.mxu0 %v74
    %94 = vmatpush.msra.mxu0 %v73
    %95 = vmatpush.msra.mxu0 %v72
    %96 = vmatpush.msra.mxu0 %v71
    %97 = vmatpush.msra.mxu0 %v70
    %98 = vmatpush.msra.mxu0 %v69
    %99 = vmatpush.msra.mxu0 %v68
    %100 = vmatpush.msra.mxu0 %v67
    %101 = vmatpush.msra.mxu0 %v66
    %102 = vmatmul.f32.gmra.mxu0 %v62
    %v103 = vpop.f32.mrf.mxu0
    %v104 = vadd.f32 %v82, %v103
    %105 = vmatmul.f32.gmra.mxu0 %v63
    %v106 = vpop.f32.mrf.mxu0
    %v107 = vadd.f32 %v83, %v106
    %108 = vmatmul.f32.gmra.mxu0 %v64
    %v109 = vpop.f32.mrf.mxu0
    %v110 = vadd.f32 %v84, %v109
    %111 = vmatmul.f32.gmra.mxu0 %v65
    %v112 = vpop.f32.mrf.mxu0
    %v113 = vadd.f32 %v85, %v112
    %114 = vdwg.mxu0
    %115 = vst [vmem:[#allocation8] sm:$0xff] %v104
    %116 = vst [vmem:[#allocation8 + $0x8] sm:$0xff] %v107
    %117 = vst [vmem:[#allocation8 + $0x10] sm:$0xff] %v110
    %118 = vst [vmem:[#allocation8 + $0x18] sm:$0xff] %v113
    // Predicated region
    $region26: #{tpu_custom_call.1} parent=1 // pred_check
      _
    $region27: #{tpu_custom_call.1} parent=1 // pred_check_branch
      %120 = sbr.rel (0) target = $region29
    $region28: #{tpu_custom_call.1} parent=1 // pred_region
      %122 = vsyncadd [#allocation4], 0
      %s123 = sshll.u32 [#allocation8], 4
      %s124 = int_to_ptr.vmem [resolvable:$true] %s123
      %s125 = sshll.u32 %s3, 4
      %s126 = int_to_ptr.hbm [resolvable:$true] %s125
      %131 = dma.vmem_to_hbm [thread:$0]  %s124, 512, %s126, [#allocation4], 128, 128, 8
    $region29: #{tpu_custom_call.1} parent=1 // pred_fallthru
      _
    // Predicated region
    $region30: #{tpu_custom_call.1} parent=1 // pred_check
      _
    $region31: #{tpu_custom_call.1} parent=1 // pred_check_branch
      %133 = sbr.rel (0) target = $region33
    $region32: #{tpu_custom_call.1} parent=1 // pred_region
      %135 = dma.done [#allocation4], 512
    $region33: #{tpu_custom_call.1} parent=1 // pred_fallthru
      _
    %136 = vsyncpa [#allocation3], 1
    %137 = vsyncpa [#allocation6], 1
    %138 = vsyncpa [#allocation4], 1

</llo_original>
